<compile_context>
chip_gen: v7x
topology: tpu7x:2x2x1
jax: 0.10.0
libtpu: 0.0.40
codegen_flags: <defaults>
</compile_context>

<pallas_src>
import jax
import jax.numpy as jnp
from jax.experimental import pallas as pl
from jax.experimental.pallas import tpu as pltpu

_LANE = 128
_SMALL_BYPASS_BYTES = 512 * 1024          # below this, plain XLA multiply wins
_SPLIT_THRESHOLD_BYTES = 2 * 1024 * 1024  # only split a single block if halves >= 1 MiB


def _round_up(n: int, m: int) -> int:
    return ((n + m - 1) // m) * m


def _vmem_capacity_bytes() -> int:
    """Best-effort physical VMEM query; conservative (v7x) fallback."""
    try:
        cap = getattr(pltpu.get_tpu_info(), "vmem_capacity_bytes", None)
        if cap:
            return int(cap)
    except Exception:
        pass
    return 64 * 1024 * 1024


def _scale_kernel(scale_ref, x_ref, o_ref):
    # scale_ref: (1, 1) f32 scalar in SMEM (placed once); x_ref / o_ref: VMEM tiles.
    s = scale_ref[0, 0].astype(x_ref.dtype)  # one scalar convert + splat per block
    o_ref[...] = x_ref[...] * s


def _scale_2d(x2d: jax.Array, scale_smem: jax.Array) -> jax.Array:
    rows, lane = x2d.shape
    itemsize = jnp.dtype(x2d.dtype).itemsize
    sub = max(8, 32 // itemsize)  # sublane multiple: 8 f32, 16 bf16, 32 int8/fp8

    vmem_cap = _vmem_capacity_bytes()
    if vmem_cap >= 96 * 1024 * 1024:
        # v5e / v6e: 128 MiB physical VMEM -> 8 MiB blocks, raise scoped limit.
        block_bytes = 8 * 1024 * 1024
        vmem_limit = 64 * 1024 * 1024
    else:
        # v7x: 64 MiB physical / 32 MiB scoped default -> 4 MiB blocks fit as-is.
        block_bytes = 4 * 1024 * 1024
        vmem_limit = None

    max_tile_rows = max(sub, (block_bytes // (lane * itemsize)) // sub * sub)
    total_bytes = rows * lane * itemsize

    if rows <= max_tile_rows:
        if total_bytes >= _SPLIT_THRESHOLD_BYTES:
            # Two balanced blocks (>= 1 MiB each) so v7x's 2 TCs share the work.
            tile_rows = _round_up(pl.cdiv(rows, 2), sub)
        else:
            # Single full-extent block (always a legal block shape).
            tile_rows = rows
    else:
        n_blocks = pl.cdiv(rows, max_tile_rows)
        if n_blocks % 2 == 1:
            n_blocks += 1  # even, roughly equal blocks -> balanced across 2 TCs
        tile_rows = _round_up(pl.cdiv(rows, n_blocks), sub)

    grid = (pl.cdiv(rows, tile_rows),)  # partial last block is masked by Pallas

    cp_kwargs = dict(dimension_semantics=("parallel",))
    if vmem_limit is not None:
        cp_kwargs["vmem_limit_bytes"] = vmem_limit

    return pl.pallas_call(
        _scale_kernel,
        out_shape=jax.ShapeDtypeStruct((rows, lane), x2d.dtype),
        grid_spec=pltpu.PrefetchScalarGridSpec(
            num_scalar_prefetch=0,
            grid=grid,
            in_specs=[
                pl.BlockSpec(memory_space=pltpu.SMEM),              # scalar param
                pl.BlockSpec((tile_rows, lane), lambda i: (i, 0)),  # input tile
            ],
            out_specs=pl.BlockSpec((tile_rows, lane), lambda i: (i, 0)),
        ),
        compiler_params=pltpu.CompilerParams(**cp_kwargs),
    )(scale_smem, x2d)


def scale_forward(x: jax.Array, scale: jax.Array, *, force_kernel: bool = False) -> jax.Array:
    """Apply out = x * scale (scale is a 1-element parameter, like nn.Parameter([v])).

    Output keeps x.dtype.
    # TODO(synk): PyTorch promotes bf16_input * f32 Parameter to f32; we keep x.dtype.
    """
    scale = jnp.asarray(scale)
    assert scale.size == 1, "Scale expects a single-element parameter"
    orig_shape = x.shape
    orig_dtype = x.dtype
    total = x.size
    if total == 0:
        return x

    nbytes = total * jnp.dtype(orig_dtype).itemsize
    scale_scalar = scale.reshape(()).astype(orig_dtype)

    if not force_kernel and nbytes < _SMALL_BYPASS_BYTES:
        # Launch + pipeline overhead dominates tiny tensors; XLA's fused mul wins.
        return (x * scale_scalar).astype(orig_dtype)

    scale_smem = scale.reshape(1, 1).astype(jnp.float32)
    x_flat = x.reshape(-1)
    rem = total % _LANE
    main = total - rem

    if rem == 0:
        # Common FCOS path (C=256): pure metadata reshape, no extra HBM traffic.
        out2d = _scale_2d(x_flat.reshape(total // _LANE, _LANE), scale_smem)
        return out2d.reshape(orig_shape)

    if main == 0:
        return (x * scale_scalar).astype(orig_dtype)

    # Ragged tail: kernel on the 128-divisible prefix, plain JAX for the <128 tail.
    head = _scale_2d(x_flat[:main].reshape(main // _LANE, _LANE), scale_smem).reshape(-1)
    tail = (x_flat[main:] * scale_scalar).astype(orig_dtype)
    return jnp.concatenate([head, tail]).reshape(orig_shape)


if __name__ == "__main__":
    key = jax.random.PRNGKey(0)

    # Deterministic parameter init, matching Scale(init_value=1.0) semantics
    # (use a non-trivial value so the multiply is actually exercised).
    init_value = 1.0
    scale_param = jnp.array([init_value], dtype=jnp.float32) * 2.5  # scale = 2.5

    # Primary test: small FCOS-like NCHW input (batch=2, channels=4, 16x16).
    x = jax.random.normal(key, (2, 4, 16, 16), dtype=jnp.float32)
    ref = x * scale_param[0]

    # Force the Pallas kernel (this size is below the small-tensor bypass)
    # so the kernel path itself is compiled, run, and verified.
    out_kernel = jax.block_until_ready(scale_forward(x, scale_param, force_kernel=True))
    assert out_kernel.shape == x.shape and out_kernel.dtype == x.dtype
    assert jnp.allclose(out_kernel, ref, atol=1e-6, rtol=1e-6)

    # Default path (small-tensor bypass) must match too.
    out_bypass = jax.block_until_ready(scale_forward(x, scale_param))
    assert jnp.allclose(out_bypass, ref, atol=1e-6, rtol=1e-6)

    # Medium tensor (2 MiB f32): exercises the balanced multi-block grid.
    x_big = jax.random.normal(jax.random.PRNGKey(1), (2, 256, 32, 32), dtype=jnp.float32)
    out_big = jax.block_until_ready(scale_forward(x_big, scale_param))
    assert jnp.allclose(out_big, x_big * scale_param[0], atol=1e-6, rtol=1e-6)

    # Ragged (non-128-divisible) size above the bypass: prefix kernel + JAX tail.
    x_rag = jax.random.normal(jax.random.PRNGKey(2), (2, 7, 197, 101), dtype=jnp.float32)
    out_rag = jax.block_until_ready(scale_forward(x_rag, scale_param))
    assert jnp.allclose(out_rag, x_rag * scale_param[0], atol=1e-6, rtol=1e-6)

    print("KERNEL_OK")
</pallas_src>

<mosaic_0001>
module attributes {stable_mosaic.version = 11 : i64} {
  func.func @_scale_kernel(%arg0: i32, %arg1: memref<1x1xf32, #tpu.memory_space<smem>>, %arg2: memref<16x128xf32, #tpu.memory_space<vmem>>, %arg3: memref<16x128xf32, #tpu.memory_space<vmem>>) attributes {dimension_semantics = [#tpu.dimension_semantics<parallel>], iteration_bounds = array<i64: 1>, scalar_prefetch = 0 : i64, scratch_operands = 0 : i64, tpu.core_type = #tpu.core_type<tc>, window_params = [{transform_indices = @transform_0, window_bounds = array<i64: 1, 1>}, {transform_indices = @transform_1, window_bounds = array<i64: 16, 128>}, {transform_indices = @transform_2, window_bounds = array<i64: 16, 128>}]} {
    %c0 = arith.constant 0 : index
    %c0_0 = arith.constant 0 : index
    %0 = memref.load %arg1[%c0, %c0_0] : memref<1x1xf32, #tpu.memory_space<smem>>
    %c0_1 = arith.constant 0 : index
    %c0_2 = arith.constant 0 : index
    %1 = vector.load %arg2[%c0_1, %c0_2] : memref<16x128xf32, #tpu.memory_space<vmem>>, vector<16x128xf32>
    %2 = vector.broadcast %0 : f32 to vector<16x128xf32>
    %3 = arith.mulf %1, %2 : vector<16x128xf32>
    %c0_3 = arith.constant 0 : index
    %c0_4 = arith.constant 0 : index
    %4 = vector.load %arg3[%c0_3, %c0_4] : memref<16x128xf32, #tpu.memory_space<vmem>>, vector<16x128xf32>
    tpu.vector_store %arg3[%c0_3, %c0_4], %3 {strides = array<i32>} : memref<16x128xf32, #tpu.memory_space<vmem>>, vector<16x128xf32>,
    return
  }
  func.func @transform_0(%arg0: i32) -> (i32, i32) {
    %c0_i32 = arith.constant 0 : i32
    %c0_i32_0 = arith.constant 0 : i32
    %c0_i32_1 = arith.constant 0 : i32
    return %c0_i32, %c0_i32_0 : i32, i32
  }
  func.func @transform_1(%arg0: i32) -> (i32, i32) {
    %c0_i32 = arith.constant 0 : i32
    %c0_i32_0 = arith.constant 0 : i32
    return %arg0, %c0_i32 : i32, i32
  }
  func.func @transform_2(%arg0: i32) -> (i32, i32) {
    %c0_i32 = arith.constant 0 : i32
    %c0_i32_0 = arith.constant 0 : i32
    return %arg0, %c0_i32 : i32, i32
  }
}

</mosaic_0001>

<llo_original>
// kernel: tpu_custom_call.1
$region0: #{tpu_custom_call.1}
  #allocation0 [shape = 'u32[]', space=smem, size = 0x4, offset = 0x4, fixed_abs, tag = 'smem constant byte address 0x4 - core index']
  #allocation1 [shape = 'u32[144,128]{1,0:T(1,128)}', space=vmem, size = 0x12000, scoped, tag = 'internal scratch']
  #allocation2 [shape = 'f32[1,1]{1,0:T(1,128)S(6)}', space=smem, size = 0x200, scoped, tag = 'scoped memory for tpu_custom_call.1']
  %s0 = inlined_call_operand.<no memory space> [shape: f32[1,1], index: 0, kind: input, shape index: {}]
  %s1 = inlined_call_operand.hbm [shape: f32[16,128], index: 1, kind: input, shape index: {}]
  %s2 = inlined_call_operand.hbm [shape: f32[16,128], index: 2, kind: output, shape index: {}]
  %s3 = sld [smem:[#allocation0]]
  $region22: #{tpu_custom_call.1} parent=0
    _
  %s5 = ssub.s32 1, %s3
  %s6 = scalar_select 0, %s5, %s3
  %7 = sst [smem:[#allocation2]] %s0
  $region1: #{tpu_custom_call.1} parent=0
    #allocation3 [shape = 'u8[8192]{0}', space=vmem, size = 0x2000, scoped, tag = 'input window, operand 1, single buffered']
    #allocation4 [shape = 's32[1]{0}', space=sflag, size = 0x4, scoped, tag = 'scoped memory for tpu_custom_call.1']
    #allocation5 [shape = 's32[1]{0}', space=sflag, size = 0x4, scoped, tag = 'scoped memory for tpu_custom_call.1']
    #allocation6 [shape = 'u8[8192]{0}', space=vmem, size = 0x2000, scoped, tag = 'output window, operand 0, single buffered']
    %8 = vsyncpa [#allocation4], 0
    %9 = vsyncpa [#allocation5], 0
    // Predicated region
    $region2: #{tpu_custom_call.1} parent=1 // pred_check
      _
    $region3: #{tpu_custom_call.1} parent=1 // pred_check_branch
      %11 = sbr.rel (0) target = $region5
    $region4: #{tpu_custom_call.1} parent=1 // pred_region
      _
    $region5: #{tpu_custom_call.1} parent=1 // pred_fallthru
      _
    // Predicated region
    $region6: #{tpu_custom_call.1} parent=1 // pred_check
      _
    $region7: #{tpu_custom_call.1} parent=1 // pred_check_branch
      %13 = sbr.rel (0) target = $region9
    $region8: #{tpu_custom_call.1} parent=1 // pred_region
      %s15 = ssub.s32 256, 256
      %16 = vsyncadd [#allocation4], %s15
      %s17 = sshll.u32 [#allocation3], 4
      %s18 = int_to_ptr.vmem [resolvable:$true] %s17
      %23 = dma.hbm_to_vmem [thread:$0]  %s1, 256, %s18, [#allocation4], 128, 128, 8
    $region9: #{tpu_custom_call.1} parent=1 // pred_fallthru
      _
    // Predicated region
    $region10: #{tpu_custom_call.1} parent=1 // pred_check
      _
    $region11: #{tpu_custom_call.1} parent=1 // pred_check_branch
      %25 = sbr.rel (0) target = $region13
    $region12: #{tpu_custom_call.1} parent=1 // pred_region
      %26 = dma.done [#allocation4], 256
    $region13: #{tpu_custom_call.1} parent=1 // pred_fallthru
      _
    %s27 = sld [smem:[#allocation2]]
    %v28 = vld [vmem:[#allocation3] sm:$0xff]
    %v29 = vld [vmem:[#allocation3 + $0x8] sm:$0xff]
    %v30 = vstv %s27
    %v31 = vmul.f32 %v28, %v30
    %v32 = vmul.f32 %v29, %v30
    %33 = vst [vmem:[#allocation6] sm:$0xff] %v31
    %34 = vst [vmem:[#allocation6 + $0x8] sm:$0xff] %v32
    // Predicated region
    $region14: #{tpu_custom_call.1} parent=1 // pred_check
      _
    $region15: #{tpu_custom_call.1} parent=1 // pred_check_branch
      %36 = sbr.rel (0) target = $region17
    $region16: #{tpu_custom_call.1} parent=1 // pred_region
      %s38 = ssub.s32 256, 256
      %39 = vsyncadd [#allocation5], %s38
      %s40 = sshll.u32 [#allocation6], 4
      %s41 = int_to_ptr.vmem [resolvable:$true] %s40
      %46 = dma.vmem_to_hbm [thread:$0]  %s41, 256, %s2, [#allocation5], 128, 128, 8
    $region17: #{tpu_custom_call.1} parent=1 // pred_fallthru
      _
    // Predicated region
    $region18: #{tpu_custom_call.1} parent=1 // pred_check
      _
    $region19: #{tpu_custom_call.1} parent=1 // pred_check_branch
      %48 = sbr.rel (0) target = $region21
    $region20: #{tpu_custom_call.1} parent=1 // pred_region
      %49 = dma.done [#allocation5], 256
    $region21: #{tpu_custom_call.1} parent=1 // pred_fallthru
      _
    %50 = vsyncpa [#allocation4], 1
    %51 = vsyncpa [#allocation5], 1

</llo_original>
